<compile_context>
chip_gen: v7x
topology: tpu7x:2x2x1
jax: 0.10.0
libtpu: 0.0.40
codegen_flags: <defaults>
</compile_context>

<pallas_src>
import functools

import jax
import jax.numpy as jnp
from jax.experimental import pallas as pl
from jax.experimental.pallas import tpu as pltpu


# ---------------------------------------------------------------------------
# Kernels
# ---------------------------------------------------------------------------

def _resident_gather_kernel(idx_ref, table_ref, out_ref, *, tb, batch):
    """Path A: gather rows from the VMEM-resident embedding table.

    idx_ref   : SMEM (b_pad,) int32            scalar-prefetched class ids
    table_ref : VMEM (n_classes, embed_dim)    full table, resident across steps
    out_ref   : VMEM (tb, embed_dim)           output tile
    """
    i = pl.program_id(0)
    base = i * tb
    rem = batch % tb  # only rows j >= rem can ever be out of range (last step)

    for j in range(tb):
        def copy_row(j=j):
            row = idx_ref[base + j]
            out_ref[pl.ds(j, 1), :] = table_ref[pl.ds(row, 1), :]

        if rem != 0 and j >= rem:
            pl.when(base + j < batch)(copy_row)      # tail guard
        else:
            copy_row()


def _hbm_gather_kernel(idx_ref, table_hbm, out_ref, sems, *, tb, batch):
    """Path B: DMA rows straight from the HBM table into the output tile.

    idx_ref   : SMEM (b_pad,) int32            scalar-prefetched class ids
    table_hbm : HBM  (n_classes, embed_dim)    raw ref (memory_space=pl.ANY)
    out_ref   : VMEM (tb, embed_dim)           output tile (DMA destination)
    sems      : DMA semaphores, shape (tb,)
    """
    i = pl.program_id(0)
    base = i * tb
    rem = batch % tb

    # Read all indices from SMEM and build the copy descriptors up front
    # (before any DMA wait); the same descriptor is reused for start + wait.
    copies = []
    for j in range(tb):
        row = idx_ref[base + j]
        cp = pltpu.make_async_copy(
            table_hbm.at[pl.ds(row, 1), :],
            out_ref.at[pl.ds(j, 1), :],
            sems.at[j],
        )
        guard = None if (rem == 0 or j < rem) else (base + j < batch)
        copies.append((cp, guard))

    # Fan out every row fetch, then wait on all of them: the HBM latencies of
    # the TB fetches overlap instead of serializing one row at a time.
    for cp, guard in copies:
        if guard is None:
            cp.start()
        else:
            @pl.when(guard)
            def _(cp=cp):
                cp.start()

    for cp, guard in copies:
        if guard is None:
            cp.wait()
        else:
            @pl.when(guard)
            def _(cp=cp):
                cp.wait()


# ---------------------------------------------------------------------------
# Wrapper
# ---------------------------------------------------------------------------

_MAX_TILE_ROWS = 32      # caps unrolled DMA issues / DMA semaphores per step


def _sublane_rows(dtype):
    # Rows per packed 32-bit sublane group: 8 f32 / 16 bf16 / 32 int8.
    return max(8, 32 // jnp.dtype(dtype).itemsize)


def _choose_tile_rows(batch, dtype):
    sub = _sublane_rows(dtype)
    cap = max(sub, (_MAX_TILE_ROWS // sub) * sub)
    need = pl.cdiv(batch, sub) * sub
    if 2 * sub <= need <= cap:
        # Split into >= 2 grid steps so dimension_semantics=("parallel",)
        # can actually give both v7x TensorCores some work.
        return pl.cdiv(need // 2, sub) * sub
    return min(cap, need)


def _vmem_capacity_bytes():
    """Physical VMEM per TensorCore (64 MiB on v7x, 128 MiB on v5e/v6e)."""
    try:
        info = pltpu.get_tpu_info()
        for name in ("vmem_capacity_bytes", "vmem_size_bytes", "vmem_bytes"):
            v = getattr(info, name, None)
            if v:
                return int(v)
    except Exception:
        pass
    return 64 << 20      # conservative default (v7x-sized)


def embedding_lookup(indices, embedding_table, *, force_hbm_gather=False):
    """(B,) int ids + (n_classes, embed_dim) table -> (B, embed_dim)."""
    B = int(indices.shape[0])
    n_classes, embed_dim = embedding_table.shape
    dtype = embedding_table.dtype
    itemsize = jnp.dtype(dtype).itemsize

    # torch.nn.Embedding raises on out-of-range ids; clamp instead of silently
    # DMA-ing from a wrong row (OOB addresses are not runtime-checked on TPU).
    idx = jnp.clip(indices.astype(jnp.int32), 0, n_classes - 1)

    tb = _choose_tile_rows(B, dtype)
    b_pad = pl.cdiv(B, tb) * tb
    if b_pad != B:
        idx = jnp.pad(idx, (0, b_pad - B))       # pad ids with 0 (a valid row)

    # Generation-aware residency cutover: budget ~half of physical VMEM for
    # the (worst-case double-buffered) resident table, leaving headroom for
    # the double-buffered output tiles and compiler scratch.
    vmem_cap = _vmem_capacity_bytes()
    table_bytes = int(n_classes) * int(embed_dim) * itemsize
    tile_bytes = tb * int(embed_dim) * itemsize
    table_budget = max(0, vmem_cap // 2 - (4 << 20))
    # TODO(synk): packed (<32-bit) tables always take the HBM-gather path;
    # dynamic packed-sublane slices of a resident VMEM table may not lower.
    use_resident = (
        (not force_hbm_gather)
        and itemsize == 4
        and 2 * table_bytes <= table_budget
    )

    needed = 2 * tile_bytes + (2 * table_bytes if use_resident else 0)
    vmem_limit = int(min(vmem_cap * 7 // 8, max(needed + (4 << 20), 32 << 20)))

    grid = (b_pad // tb,)
    out_shape = jax.ShapeDtypeStruct((b_pad, embed_dim), dtype)
    out_spec = pl.BlockSpec((tb, embed_dim), lambda i, idx_ref: (i, 0))
    compiler_params = pltpu.CompilerParams(
        dimension_semantics=("parallel",),       # shard tiles across TCs (v7x)
        vmem_limit_bytes=vmem_limit,
    )

    if use_resident:
        out = pl.pallas_call(
            functools.partial(_resident_gather_kernel, tb=tb, batch=B),
            out_shape=out_shape,
            grid_spec=pltpu.PrefetchScalarGridSpec(
                num_scalar_prefetch=1,           # class ids -> SMEM
                grid=grid,
                in_specs=[
                    # Full-table block with a constant index_map: fetched once
                    # as one contiguous DMA, then resident for every step.
                    pl.BlockSpec((n_classes, embed_dim),
                                 lambda i, idx_ref: (0, 0)),
                ],
                out_specs=out_spec,
            ),
            compiler_params=compiler_params,
        )(idx, embedding_table)
    else:
        out = pl.pallas_call(
            functools.partial(_hbm_gather_kernel, tb=tb, batch=B),
            out_shape=out_shape,
            grid_spec=pltpu.PrefetchScalarGridSpec(
                num_scalar_prefetch=1,           # class ids -> SMEM
                grid=grid,
                in_specs=[pl.BlockSpec(memory_space=pl.ANY)],  # table in HBM
                out_specs=out_spec,
                scratch_shapes=[pltpu.SemaphoreType.DMA((tb,))],
            ),
            compiler_params=compiler_params,
        )(idx, embedding_table)

    return out[:B] if b_pad != B else out


def class_embedder_forward(batch, embedding_table, key="class", context=None):
    """Pallas equivalent of ClassEmbedder.forward (fic_module=None)."""
    # TODO(synk): fic_module is an arbitrary user-supplied module (None by
    # default in __init__), so the `context is not None` branch is not implemented.
    c = embedding_lookup(batch[key], embedding_table)    # (B, embed_dim)
    return c[:, None, :]                                 # (B, 1, embed_dim)


if __name__ == "__main__":
    rng = jax.random.PRNGKey(0)

    def run_case(n_classes, embed_dim, batch, dtype, k, force_hbm=False):
        k_w, k_i = jax.random.split(k)
        # nn.Embedding default init: weight ~ N(0, 1)
        table = jax.random.normal(
            k_w, (n_classes, embed_dim), dtype=jnp.float32).astype(dtype)
        ids = jax.random.randint(k_i, (batch,), 0, n_classes, dtype=jnp.int32)

        if force_hbm:
            c = embedding_lookup(ids, table, force_hbm_gather=True)[:, None, :]
        else:
            c = class_embedder_forward({"class": ids}, table)
        c = jax.block_until_ready(c)

        ref = jnp.take(table, ids, axis=0)[:, None, :]
        assert c.shape == (batch, 1, embed_dim), c.shape
        assert c.dtype == table.dtype
        assert jnp.array_equal(c, ref), "mismatch vs reference embedding lookup"

    k1, k2, k3, k4 = jax.random.split(rng, 4)
    # VMEM-resident fast path, single grid step, partial (guarded) tail tile
    run_case(n_classes=16, embed_dim=128, batch=2, dtype=jnp.float32, k=k1)
    # VMEM-resident fast path, batch not a multiple of the tile -> 2 steps + guards
    run_case(n_classes=24, embed_dim=256, batch=19, dtype=jnp.float32, k=k2)
    # bf16 (packed) table -> HBM-gather path with TB=16 sublane packing
    run_case(n_classes=32, embed_dim=128, batch=10, dtype=jnp.bfloat16, k=k3)
    # Force the HBM-gather fallback for an f32 table (oversized-table path)
    run_case(n_classes=64, embed_dim=128, batch=19, dtype=jnp.float32, k=k4,
             force_hbm=True)

    print("KERNEL_OK")
</pallas_src>

<mosaic_0001>
module attributes {stable_mosaic.version = 11 : i64} {
  func.func @_resident_gather_kernel(%arg0: i32, %arg1: memref<8xi32, #tpu.memory_space<smem>>, %arg2: memref<16x128xf32, #tpu.memory_space<vmem>>, %arg3: memref<8x128xf32, #tpu.memory_space<vmem>>) attributes {dimension_semantics = [#tpu.dimension_semantics<parallel>], iteration_bounds = array<i64: 1>, scalar_prefetch = 1 : i64, scratch_operands = 0 : i64, tpu.core_type = #tpu.core_type<tc>, window_params = [{pipeline_mode = #tpu.pipeline_mode<synchronous>, transform_indices = @transform_0, window_bounds = array<i64: 16, 128>}, {transform_indices = @transform_1, window_bounds = array<i64: 8, 128>}]} {
    %c8_i32 = arith.constant 8 : i32
    %0 = arith.muli %arg0, %c8_i32 : i32
    %c0_i32 = arith.constant 0 : i32
    %1 = arith.addi %0, %c0_i32 : i32
    %2 = arith.index_cast %1 : i32 to index
    %3 = memref.load %arg1[%2] : memref<8xi32, #tpu.memory_space<smem>>
    %4 = arith.index_cast %3 : i32 to index
    %c0 = arith.constant 0 : index
    %5 = vector.load %arg2[%4, %c0] : memref<16x128xf32, #tpu.memory_space<vmem>>, vector<1x128xf32>
    %c0_0 = arith.constant 0 : index
    %c0_1 = arith.constant 0 : index
    %6 = vector.load %arg3[%c0_0, %c0_1] : memref<8x128xf32, #tpu.memory_space<vmem>>, vector<1x128xf32>
    tpu.vector_store %arg3[%c0_0, %c0_1], %5 {strides = array<i32>} : memref<8x128xf32, #tpu.memory_space<vmem>>, vector<1x128xf32>,
    %c1_i32 = arith.constant 1 : i32
    %7 = arith.addi %0, %c1_i32 : i32
    %8 = arith.index_cast %7 : i32 to index
    %9 = memref.load %arg1[%8] : memref<8xi32, #tpu.memory_space<smem>>
    %10 = arith.index_cast %9 : i32 to index
    %c0_2 = arith.constant 0 : index
    %11 = vector.load %arg2[%10, %c0_2] : memref<16x128xf32, #tpu.memory_space<vmem>>, vector<1x128xf32>
    %c1 = arith.constant 1 : index
    %c0_3 = arith.constant 0 : index
    %12 = vector.load %arg3[%c1, %c0_3] : memref<8x128xf32, #tpu.memory_space<vmem>>, vector<1x128xf32>
    tpu.vector_store %arg3[%c1, %c0_3], %11 {strides = array<i32>} : memref<8x128xf32, #tpu.memory_space<vmem>>, vector<1x128xf32>,
    %c2_i32 = arith.constant 2 : i32
    %13 = arith.addi %0, %c2_i32 : i32
    %c2_i32_4 = arith.constant 2 : i32
    %14 = arith.cmpi slt, %13, %c2_i32_4 : i32
    %15 = arith.extui %14 : i1 to i32
    %c0_i32_5 = arith.constant 0 : i32
    %16 = arith.cmpi ne, %15, %c0_i32_5 : i32
    scf.if %16 {
      %c2_i32_16 = arith.constant 2 : i32
      %37 = arith.addi %0, %c2_i32_16 : i32
      %38 = arith.index_cast %37 : i32 to index
      %39 = memref.load %arg1[%38] : memref<8xi32, #tpu.memory_space<smem>>
      %40 = arith.index_cast %39 : i32 to index
      %c0_17 = arith.constant 0 : index
      %41 = vector.load %arg2[%40, %c0_17] : memref<16x128xf32, #tpu.memory_space<vmem>>, vector<1x128xf32>
      %c2 = arith.constant 2 : index
      %c0_18 = arith.constant 0 : index
      %42 = vector.load %arg3[%c2, %c0_18] : memref<8x128xf32, #tpu.memory_space<vmem>>, vector<1x128xf32>
      tpu.vector_store %arg3[%c2, %c0_18], %41 {strides = array<i32>} : memref<8x128xf32, #tpu.memory_space<vmem>>, vector<1x128xf32>,
    } else {
    }
    %c3_i32 = arith.constant 3 : i32
    %17 = arith.addi %0, %c3_i32 : i32
    %c2_i32_6 = arith.constant 2 : i32
    %18 = arith.cmpi slt, %17, %c2_i32_6 : i32
    %19 = arith.extui %18 : i1 to i32
    %c0_i32_7 = arith.constant 0 : i32
    %20 = arith.cmpi ne, %19, %c0_i32_7 : i32
    scf.if %20 {
      %c3_i32_16 = arith.constant 3 : i32
      %37 = arith.addi %0, %c3_i32_16 : i32
      %38 = arith.index_cast %37 : i32 to index
      %39 = memref.load %arg1[%38] : memref<8xi32, #tpu.memory_space<smem>>
      %40 = arith.index_cast %39 : i32 to index
      %c0_17 = arith.constant 0 : index
      %41 = vector.load %arg2[%40, %c0_17] : memref<16x128xf32, #tpu.memory_space<vmem>>, vector<1x128xf32>
      %c3 = arith.constant 3 : index
      %c0_18 = arith.constant 0 : index
      %42 = vector.load %arg3[%c3, %c0_18] : memref<8x128xf32, #tpu.memory_space<vmem>>, vector<1x128xf32>
      tpu.vector_store %arg3[%c3, %c0_18], %41 {strides = array<i32>} : memref<8x128xf32, #tpu.memory_space<vmem>>, vector<1x128xf32>,
    } else {
    }
    %c4_i32 = arith.constant 4 : i32
    %21 = arith.addi %0, %c4_i32 : i32
    %c2_i32_8 = arith.constant 2 : i32
    %22 = arith.cmpi slt, %21, %c2_i32_8 : i32
    %23 = arith.extui %22 : i1 to i32
    %c0_i32_9 = arith.constant 0 : i32
    %24 = arith.cmpi ne, %23, %c0_i32_9 : i32
    scf.if %24 {
      %c4_i32_16 = arith.constant 4 : i32
      %37 = arith.addi %0, %c4_i32_16 : i32
      %38 = arith.index_cast %37 : i32 to index
      %39 = memref.load %arg1[%38] : memref<8xi32, #tpu.memory_space<smem>>
      %40 = arith.index_cast %39 : i32 to index
      %c0_17 = arith.constant 0 : index
      %41 = vector.load %arg2[%40, %c0_17] : memref<16x128xf32, #tpu.memory_space<vmem>>, vector<1x128xf32>
      %c4 = arith.constant 4 : index
      %c0_18 = arith.constant 0 : index
      %42 = vector.load %arg3[%c4, %c0_18] : memref<8x128xf32, #tpu.memory_space<vmem>>, vector<1x128xf32>
      tpu.vector_store %arg3[%c4, %c0_18], %41 {strides = array<i32>} : memref<8x128xf32, #tpu.memory_space<vmem>>, vector<1x128xf32>,
    } else {
    }
    %c5_i32 = arith.constant 5 : i32
    %25 = arith.addi %0, %c5_i32 : i32
    %c2_i32_10 = arith.constant 2 : i32
    %26 = arith.cmpi slt, %25, %c2_i32_10 : i32
    %27 = arith.extui %26 : i1 to i32
    %c0_i32_11 = arith.constant 0 : i32
    %28 = arith.cmpi ne, %27, %c0_i32_11 : i32
    scf.if %28 {
      %c5_i32_16 = arith.constant 5 : i32
      %37 = arith.addi %0, %c5_i32_16 : i32
      %38 = arith.index_cast %37 : i32 to index
      %39 = memref.load %arg1[%38] : memref<8xi32, #tpu.memory_space<smem>>
      %40 = arith.index_cast %39 : i32 to index
      %c0_17 = arith.constant 0 : index
      %41 = vector.load %arg2[%40, %c0_17] : memref<16x128xf32, #tpu.memory_space<vmem>>, vector<1x128xf32>
      %c5 = arith.constant 5 : index
      %c0_18 = arith.constant 0 : index
      %42 = vector.load %arg3[%c5, %c0_18] : memref<8x128xf32, #tpu.memory_space<vmem>>, vector<1x128xf32>
      tpu.vector_store %arg3[%c5, %c0_18], %41 {strides = array<i32>} : memref<8x128xf32, #tpu.memory_space<vmem>>, vector<1x128xf32>,
    } else {
    }
    %c6_i32 = arith.constant 6 : i32
    %29 = arith.addi %0, %c6_i32 : i32
    %c2_i32_12 = arith.constant 2 : i32
    %30 = arith.cmpi slt, %29, %c2_i32_12 : i32
    %31 = arith.extui %30 : i1 to i32
    %c0_i32_13 = arith.constant 0 : i32
    %32 = arith.cmpi ne, %31, %c0_i32_13 : i32
    scf.if %32 {
      %c6_i32_16 = arith.constant 6 : i32
      %37 = arith.addi %0, %c6_i32_16 : i32
      %38 = arith.index_cast %37 : i32 to index
      %39 = memref.load %arg1[%38] : memref<8xi32, #tpu.memory_space<smem>>
      %40 = arith.index_cast %39 : i32 to index
      %c0_17 = arith.constant 0 : index
      %41 = vector.load %arg2[%40, %c0_17] : memref<16x128xf32, #tpu.memory_space<vmem>>, vector<1x128xf32>
      %c6 = arith.constant 6 : index
      %c0_18 = arith.constant 0 : index
      %42 = vector.load %arg3[%c6, %c0_18] : memref<8x128xf32, #tpu.memory_space<vmem>>, vector<1x128xf32>
      tpu.vector_store %arg3[%c6, %c0_18], %41 {strides = array<i32>} : memref<8x128xf32, #tpu.memory_space<vmem>>, vector<1x128xf32>,
    } else {
    }
    %c7_i32 = arith.constant 7 : i32
    %33 = arith.addi %0, %c7_i32 : i32
    %c2_i32_14 = arith.constant 2 : i32
    %34 = arith.cmpi slt, %33, %c2_i32_14 : i32
    %35 = arith.extui %34 : i1 to i32
    %c0_i32_15 = arith.constant 0 : i32
    %36 = arith.cmpi ne, %35, %c0_i32_15 : i32
    scf.if %36 {
      %c7_i32_16 = arith.constant 7 : i32
      %37 = arith.addi %0, %c7_i32_16 : i32
      %38 = arith.index_cast %37 : i32 to index
      %39 = memref.load %arg1[%38] : memref<8xi32, #tpu.memory_space<smem>>
      %40 = arith.index_cast %39 : i32 to index
      %c0_17 = arith.constant 0 : index
      %41 = vector.load %arg2[%40, %c0_17] : memref<16x128xf32, #tpu.memory_space<vmem>>, vector<1x128xf32>
      %c7 = arith.constant 7 : index
      %c0_18 = arith.constant 0 : index
      %42 = vector.load %arg3[%c7, %c0_18] : memref<8x128xf32, #tpu.memory_space<vmem>>, vector<1x128xf32>
      tpu.vector_store %arg3[%c7, %c0_18], %41 {strides = array<i32>} : memref<8x128xf32, #tpu.memory_space<vmem>>, vector<1x128xf32>,
    } else {
    }
    return
  }
  func.func @transform_0(%arg0: i32, %arg1: memref<8xi32, #tpu.memory_space<smem>>) -> (i32, i32) {
    %c0_i32 = arith.constant 0 : i32
    %c0_i32_0 = arith.constant 0 : i32
    %c0_i32_1 = arith.constant 0 : i32
    return %c0_i32, %c0_i32_0 : i32, i32
  }
  func.func @transform_1(%arg0: i32, %arg1: memref<8xi32, #tpu.memory_space<smem>>) -> (i32, i32) {
    %c0_i32 = arith.constant 0 : i32
    %c0_i32_0 = arith.constant 0 : i32
    return %arg0, %c0_i32 : i32, i32
  }
}

</mosaic_0001>

<llo_original>
// kernel: tpu_custom_call.1
$region0: #{tpu_custom_call.1}
  #allocation0 [shape = 'u32[]', space=smem, size = 0x4, offset = 0x4, fixed_abs, tag = 'smem constant byte address 0x4 - core index']
  #allocation1 [shape = 'u32[144,128]{1,0:T(1,128)}', space=vmem, size = 0x12000, scoped, tag = 'internal scratch']
  #allocation2 [shape = 's32[1]{0}', space=sflag, size = 0x4, scoped, tag = 'scoped memory for tpu_custom_call.1']
  #allocation3 [shape = 'u8[512]{0}', space=smem, size = 0x200, scoped, tag = 'prefetched SMEM operand 0']
  %s0 = inlined_call_operand.hbm [shape: s32[8], index: 0, kind: input, shape index: {}]
  %s1 = inlined_call_operand.hbm [shape: f32[16,128], index: 1, kind: input, shape index: {}]
  %s2 = inlined_call_operand.hbm [shape: f32[8,128], index: 2, kind: output, shape index: {}]
  %s3 = sld [smem:[#allocation0]]
  $region42: #{tpu_custom_call.1} parent=0
    _
  %s5 = ssub.s32 1, %s3
  %s6 = scalar_select 0, %s5, %s3
  %8 = dma.hbm_to_smem %s0, 16, [#allocation3], [#allocation2]
  %9 = dma.done [#allocation2], 16
  %10 = sfence
  $region1: #{tpu_custom_call.1} parent=0
    #allocation4 [shape = 'u8[8192]{0}', space=vmem, size = 0x2000, scoped, tag = 'input window, operand 1, single buffered']
    #allocation5 [shape = 's32[1]{0}', space=sflag, size = 0x4, scoped, tag = 'scoped memory for tpu_custom_call.1']
    #allocation6 [shape = 's32[1]{0}', space=sflag, size = 0x4, scoped, tag = 'scoped memory for tpu_custom_call.1']
    #allocation7 [shape = 'u8[4096]{0}', space=vmem, size = 0x1000, scoped, tag = 'output window, operand 0, single buffered']
    %11 = vsyncpa [#allocation5], 0
    %12 = vsyncpa [#allocation6], 0
    // Predicated region
    $region2: #{tpu_custom_call.1} parent=1 // pred_check
      _
    $region3: #{tpu_custom_call.1} parent=1 // pred_check_branch
      %14 = sbr.rel (0) target = $region5
    $region4: #{tpu_custom_call.1} parent=1 // pred_region
      %s16 = ssub.s32 256, 256
      %17 = vsyncadd [#allocation5], %s16
      %s18 = sshll.u32 [#allocation4], 4
      %s19 = int_to_ptr.vmem [resolvable:$true] %s18
      %24 = dma.hbm_to_vmem [thread:$0]  %s1, 256, %s19, [#allocation5], 128, 128, 8
    $region5: #{tpu_custom_call.1} parent=1 // pred_fallthru
      _
    // Predicated region
    $region6: #{tpu_custom_call.1} parent=1 // pred_check
      _
    $region7: #{tpu_custom_call.1} parent=1 // pred_check_branch
      %26 = sbr.rel (0) target = $region9
    $region8: #{tpu_custom_call.1} parent=1 // pred_region
      %27 = dma.done [#allocation5], 256
    $region9: #{tpu_custom_call.1} parent=1 // pred_fallthru
      _
    %s28 = smul.u32 0, 8
    %s29 = sld [smem:[#allocation3 + %s28]]
    %s30 = scalar_lea.vmem [#allocation4], %s29
    %v31 = vld [vmem:[%s30] sm:$0x1]
    %32 = vst [vmem:[#allocation7] sm:$0x1] %v31
    %s33 = sadd.s32 %s28, 1
    %s34 = sld [smem:[#allocation3 + %s33]]
    %s35 = scalar_lea.vmem [#allocation4], %s34
    %v36 = vld [vmem:[%s35] sm:$0x1]
    %37 = vst [vmem:[#allocation7 + $0x1] sm:$0x1] %v36
    %s38 = sadd.s32 %s28, 2
    %p39 = scmp.lt.s32.totalorder %s38, 2
    // Predicated region
    $region10: #{tpu_custom_call.1} parent=1 // pred_check
      %p40 = pneg %p39
    $region11: #{tpu_custom_call.1} parent=1 // pred_check_branch
      %42 = sbr.rel (%p40) target = $region13
    $region12: #{tpu_custom_call.1} parent=1 // pred_region
      %s43 = sld [smem:[#allocation3 + %s38]]
      %s44 = scalar_lea.vmem [#allocation4], %s43
      %v45 = vld [vmem:[%s44] sm:$0x1]
      %46 = vst [vmem:[#allocation7 + $0x2] sm:$0x1] %v45
    $region13: #{tpu_custom_call.1} parent=1 // pred_fallthru
      _
    %s47 = sadd.s32 %s28, 3
    %p48 = scmp.lt.s32.totalorder %s47, 2
    // Predicated region
    $region14: #{tpu_custom_call.1} parent=1 // pred_check
      %p49 = pneg %p48
    $region15: #{tpu_custom_call.1} parent=1 // pred_check_branch
      %51 = sbr.rel (%p49) target = $region17
    $region16: #{tpu_custom_call.1} parent=1 // pred_region
      %s52 = sld [smem:[#allocation3 + %s47]]
      %s53 = scalar_lea.vmem [#allocation4], %s52
      %v54 = vld [vmem:[%s53] sm:$0x1]
      %55 = vst [vmem:[#allocation7 + $0x3] sm:$0x1] %v54
    $region17: #{tpu_custom_call.1} parent=1 // pred_fallthru
      _
    %s56 = sadd.s32 %s28, 4
    %p57 = scmp.lt.s32.totalorder %s56, 2
    // Predicated region
    $region18: #{tpu_custom_call.1} parent=1 // pred_check
      %p58 = pneg %p57
    $region19: #{tpu_custom_call.1} parent=1 // pred_check_branch
      %60 = sbr.rel (%p58) target = $region21
    $region20: #{tpu_custom_call.1} parent=1 // pred_region
      %s61 = sld [smem:[#allocation3 + %s56]]
      %s62 = scalar_lea.vmem [#allocation4], %s61
      %v63 = vld [vmem:[%s62] sm:$0x1]
      %64 = vst [vmem:[#allocation7 + $0x4] sm:$0x1] %v63
    $region21: #{tpu_custom_call.1} parent=1 // pred_fallthru
      _
    %s65 = sadd.s32 %s28, 5
    %p66 = scmp.lt.s32.totalorder %s65, 2
    // Predicated region
    $region22: #{tpu_custom_call.1} parent=1 // pred_check
      %p67 = pneg %p66
    $region23: #{tpu_custom_call.1} parent=1 // pred_check_branch
      %69 = sbr.rel (%p67) target = $region25
    $region24: #{tpu_custom_call.1} parent=1 // pred_region
      %s70 = sld [smem:[#allocation3 + %s65]]
      %s71 = scalar_lea.vmem [#allocation4], %s70
      %v72 = vld [vmem:[%s71] sm:$0x1]
      %73 = vst [vmem:[#allocation7 + $0x5] sm:$0x1] %v72
    $region25: #{tpu_custom_call.1} parent=1 // pred_fallthru
      _
    %s74 = sadd.s32 %s28, 6
    %p75 = scmp.lt.s32.totalorder %s74, 2
    // Predicated region
    $region26: #{tpu_custom_call.1} parent=1 // pred_check
      %p76 = pneg %p75
    $region27: #{tpu_custom_call.1} parent=1 // pred_check_branch
      %78 = sbr.rel (%p76) target = $region29
    $region28: #{tpu_custom_call.1} parent=1 // pred_region
      %s79 = sld [smem:[#allocation3 + %s74]]
      %s80 = scalar_lea.vmem [#allocation4], %s79
      %v81 = vld [vmem:[%s80] sm:$0x1]
      %82 = vst [vmem:[#allocation7 + $0x6] sm:$0x1] %v81
    $region29: #{tpu_custom_call.1} parent=1 // pred_fallthru
      _
    %s83 = sadd.s32 %s28, 7
    %p84 = scmp.lt.s32.totalorder %s83, 2
    // Predicated region
    $region30: #{tpu_custom_call.1} parent=1 // pred_check
      %p85 = pneg %p84
    $region31: #{tpu_custom_call.1} parent=1 // pred_check_branch
      %87 = sbr.rel (%p85) target = $region33
    $region32: #{tpu_custom_call.1} parent=1 // pred_region
      %s88 = sld [smem:[#allocation3 + %s83]]
      %s89 = scalar_lea.vmem [#allocation4], %s88
      %v90 = vld [vmem:[%s89] sm:$0x1]
      %91 = vst [vmem:[#allocation7 + $0x7] sm:$0x1] %v90
    $region33: #{tpu_custom_call.1} parent=1 // pred_fallthru
      _
    // Predicated region
    $region34: #{tpu_custom_call.1} parent=1 // pred_check
      _
    $region35: #{tpu_custom_call.1} parent=1 // pred_check_branch
      %93 = sbr.rel (0) target = $region37
    $region36: #{tpu_custom_call.1} parent=1 // pred_region
      %s95 = ssub.s32 128, 128
      %96 = vsyncadd [#allocation6], %s95
      %s98 = sshll.u32 [#allocation7], 4
      %s99 = int_to_ptr.vmem [resolvable:$true] %s98
      %101 = dma.vmem_to_hbm [thread:$0]  %s99, 128, %s2, [#allocation6]
    $region37: #{tpu_custom_call.1} parent=1 // pred_fallthru
      _
    // Predicated region
    $region38: #{tpu_custom_call.1} parent=1 // pred_check
      _
    $region39: #{tpu_custom_call.1} parent=1 // pred_check_branch
      %103 = sbr.rel (0) target = $region41
    $region40: #{tpu_custom_call.1} parent=1 // pred_region
      %104 = dma.done [#allocation6], 128
    $region41: #{tpu_custom_call.1} parent=1 // pred_fallthru
      _
    %105 = vsyncpa [#allocation5], 1
    %106 = vsyncpa [#allocation6], 1

</llo_original>
